<compile_context>
chip_gen: v5e
topology: v5e:2x2
jax: 0.10.0
libtpu: 0.0.40
codegen_flags: <defaults>
</compile_context>

<pallas_src>
import functools

import jax
import jax.numpy as jnp
import numpy as np
from jax import lax
from jax.experimental import pallas as pl
from jax.experimental.pallas import tpu as pltpu

_INV_SQRT2 = float(1.0 / np.sqrt(2.0))


# ------------------------------ Pallas kernel -------------------------------
def _scale_conv_fused_kernel(x_ref, s72_ref, w1_ref, b1_ref, wm_ref, w2_ref,
                             b2_ref, o_ref, *, H, W, eps):
    """Fused conv1(1x1)+GELU -> modulated 3x3 conv -> conv2(1x1), per sample.

    Layouts (all lane-dense, spatial on lanes):
      x_ref   : (1, Cin, H*W)        activation, NCHW-native flat spatial
      s72_ref : (1, 1, 9*Cin)        (style) tiled 9x along taps
      w1_ref  : (Cin, Cin)           1x1 conv weight (O, I)
      b1_ref  : (Cin, 1)
      wm_ref  : (Cout, 9*Cin)        3x3 weight as (O, kh*3+kw, I) flattened
      w2_ref  : (Cout, Cout)
      b2_ref  : (Cout, 1)
      o_ref   : (1, Cout, H*W)
    """
    HW = H * W
    cin = x_ref.shape[1]

    # ---- conv1 (1x1): (O,I) @ (I,HW) + bias, exact erf-GELU (f32 epilogue) ----
    x = x_ref[0]                                                  # (Cin, HW)
    y = jnp.dot(w1_ref[...].astype(jnp.bfloat16),
                x.astype(jnp.bfloat16),
                preferred_element_type=jnp.float32)               # (Cin, HW)
    y = y + b1_ref[...]
    y = 0.5 * y * (1.0 + lax.erf(y * _INV_SQRT2))

    # ---- per-sample style modulation + demodulation of the 3x3 weights ----
    wmod = wm_ref[...] * (s72_ref[0] + 1.0)                       # (Cout, 9*Cin)
    wmod = wmod * lax.rsqrt(jnp.sum(wmod * wmod, axis=1, keepdims=True) + eps)

    # ---- build the 9 shifted taps in-register (no HBM im2col) ----
    # Lane-tile aligned zero padding on both sides of the flat spatial axis;
    # vertical out-of-bounds falls into the pad, horizontal wrap is masked.
    P = ((W + 1 + 127) // 128) * 128                              # >= W+1, 128-aligned
    zpad = jnp.zeros((cin, P), jnp.float32)
    ypad = jnp.concatenate([zpad, y, zpad], axis=1)               # (Cin, HW+2P)
    w_idx = lax.broadcasted_iota(jnp.int32, (1, HW), 1) % W       # column index
    slabs = []
    for kh in range(3):
        for kw in range(3):
            shift = (kh - 1) * W + (kw - 1)
            tap = ypad[:, P + shift: P + shift + HW]              # (Cin, HW)
            if kw == 0:                                           # needs w-1 >= 0
                tap = jnp.where(w_idx >= 1, tap, 0.0)
            elif kw == 2:                                         # needs w+1 <= W-1
                tap = jnp.where(w_idx <= W - 2, tap, 0.0)
            slabs.append(tap)
    taps = jnp.concatenate(slabs, axis=0)                         # (9*Cin, HW)

    # ---- modulated 3x3 conv as ONE K=9*Cin MXU matmul ----
    ymod = jnp.dot(wmod.astype(jnp.bfloat16), taps.astype(jnp.bfloat16),
                   preferred_element_type=jnp.float32)            # (Cout, HW)

    # ---- fused conv2 (1x1) + bias epilogue ----
    out = jnp.dot(w2_ref[...].astype(jnp.bfloat16), ymod.astype(jnp.bfloat16),
                  preferred_element_type=jnp.float32) + b2_ref[...]
    o_ref[0] = out.astype(o_ref.dtype)


# --------------------------------- wrapper -----------------------------------
def scale_conv_vgroups_forward(x_nchw, scale, p):
    B, C, H, W = x_nchw.shape
    HW = H * W

    # NCHW-native flat spatial view: channels on sublanes, H*W on lanes (free).
    x3 = x_nchw.reshape(B, C, HW)

    # to_style Linear(1 -> C): K=1, so an exact elementwise form (tiny glue).
    style = scale * p["ws"][:, 0][None, :] + p["bs"][None, :]     # (B, C)
    style72 = jnp.tile(style, (1, 9)).reshape(B, 1, 9 * C)        # (B,1,9C)

    # PyTorch 3x3 weight (O, I, kh, kw) -> (O, (kh*3+kw)*I + i) = (C, 9C)
    wm72 = jnp.transpose(p["wm"], (0, 2, 3, 1)).reshape(C, 9 * C)

    kern = functools.partial(_scale_conv_fused_kernel, H=H, W=W, eps=1e-8)
    out = pl.pallas_call(
        kern,
        out_shape=jax.ShapeDtypeStruct((B, C, HW), x_nchw.dtype),
        grid=(B,),
        in_specs=[
            pl.BlockSpec((1, C, HW), lambda b: (b, 0, 0)),        # x (per batch)
            pl.BlockSpec((1, 1, 9 * C), lambda b: (b, 0, 0)),     # style72
            pl.BlockSpec((C, C), lambda b: (0, 0)),               # w1
            pl.BlockSpec((C, 1), lambda b: (0, 0)),               # b1
            pl.BlockSpec((C, 9 * C), lambda b: (0, 0)),           # wm72
            pl.BlockSpec((C, C), lambda b: (0, 0)),               # w2
            pl.BlockSpec((C, 1), lambda b: (0, 0)),               # b2
        ],
        out_specs=pl.BlockSpec((1, C, HW), lambda b: (b, 0, 0)),
        compiler_params=pltpu.CompilerParams(
            dimension_semantics=("parallel",)),                   # megacore over B
    )(x3, style72, p["w1"], p["b1"].reshape(C, 1), wm72,
      p["w2"], p["b2"].reshape(C, 1))
    return out.reshape(B, C, H, W)                                # still NCHW, free


# --------------------------- pure-JAX reference ------------------------------
def ref_forward(x, scale, p):
    prec = lax.Precision.HIGHEST
    y = jnp.einsum("bchw,oc->bohw", x, p["w1"], precision=prec) \
        + p["b1"][None, :, None, None]
    y = jax.nn.gelu(y, approximate=False)
    style = scale @ p["ws"].T + p["bs"]                               # (B, C)
    wmod = p["wm"][None] * (style[:, None, :, None, None] + 1.0)      # (B,O,I,3,3)
    d = lax.rsqrt(jnp.sum(wmod ** 2, axis=(2, 3, 4), keepdims=True) + 1e-8)
    wmod = wmod * d
    yp = jnp.pad(y, ((0, 0), (0, 0), (1, 1), (1, 1)))

    def conv_one(xb, wb):
        return lax.conv_general_dilated(
            xb[None], wb, (1, 1), "VALID",
            dimension_numbers=("NCHW", "OIHW", "NCHW"), precision=prec)[0]

    y = jax.vmap(conv_one)(yp, wmod)
    y = jnp.einsum("bchw,oc->bohw", y, p["w2"], precision=prec) \
        + p["b2"][None, :, None, None]
    return y


# ------------------------------------ main -----------------------------------
if __name__ == "__main__":
    dim, B, H, W = 8, 2, 16, 16
    key = jax.random.PRNGKey(0)
    ks = jax.random.split(key, 8)
    params = {
        "w1": jax.random.normal(ks[0], (dim, dim), jnp.float32) * 0.2,
        "b1": jax.random.normal(ks[1], (dim,), jnp.float32) * 0.1,
        # kaiming_normal_ (fan_in = dim*3*3, leaky_relu gain sqrt(2))
        "wm": jax.random.normal(ks[2], (dim, dim, 3, 3), jnp.float32)
              * float(np.sqrt(2.0 / (dim * 9))),
        "ws": jax.random.normal(ks[3], (dim, 1), jnp.float32),
        "bs": jax.random.normal(ks[4], (dim,), jnp.float32) * 0.1,
        "w2": jax.random.normal(ks[5], (dim, dim), jnp.float32) * 0.2,
        "b2": jax.random.normal(ks[6], (dim,), jnp.float32) * 0.1,
    }
    x = jax.random.normal(ks[7], (B, dim, H, W), jnp.float32)
    scale = jax.random.normal(jax.random.PRNGKey(1), (B, 1), jnp.float32)

    out = jax.block_until_ready(jax.jit(scale_conv_vgroups_forward)(x, scale, params))
    ref = jax.block_until_ready(jax.jit(ref_forward)(x, scale, params))
    np.testing.assert_allclose(np.asarray(out), np.asarray(ref),
                               rtol=2e-2, atol=2e-2)
    print("KERNEL_OK")
</pallas_src>

<mosaic_0001>
module attributes {stable_mosaic.version = 11 : i64} {
  func.func @_scale_conv_fused_kernel(%arg0: i32, %arg1: memref<1x8x256xf32, #tpu.memory_space<vmem>>, %arg2: memref<1x1x72xf32, #tpu.memory_space<vmem>>, %arg3: memref<8x8xf32, #tpu.memory_space<vmem>>, %arg4: memref<8x1xf32, #tpu.memory_space<vmem>>, %arg5: memref<8x72xf32, #tpu.memory_space<vmem>>, %arg6: memref<8x8xf32, #tpu.memory_space<vmem>>, %arg7: memref<8x1xf32, #tpu.memory_space<vmem>>, %arg8: memref<1x8x256xf32, #tpu.memory_space<vmem>>) attributes {dimension_semantics = [#tpu.dimension_semantics<parallel>], iteration_bounds = array<i64: 2>, scalar_prefetch = 0 : i64, scratch_operands = 0 : i64, tpu.core_type = #tpu.core_type<tc>, window_params = [{transform_indices = @transform_0, window_bounds = array<i64: 1, 8, 256>}, {transform_indices = @transform_1, window_bounds = array<i64: 1, 1, 72>}, {pipeline_mode = #tpu.pipeline_mode<synchronous>, transform_indices = @transform_2, window_bounds = array<i64: 8, 8>}, {pipeline_mode = #tpu.pipeline_mode<synchronous>, transform_indices = @transform_3, window_bounds = array<i64: 8, 1>}, {pipeline_mode = #tpu.pipeline_mode<synchronous>, transform_indices = @transform_4, window_bounds = array<i64: 8, 72>}, {pipeline_mode = #tpu.pipeline_mode<synchronous>, transform_indices = @transform_5, window_bounds = array<i64: 8, 8>}, {pipeline_mode = #tpu.pipeline_mode<synchronous>, transform_indices = @transform_6, window_bounds = array<i64: 8, 1>}, {transform_indices = @transform_7, window_bounds = array<i64: 1, 8, 256>}]} {
    %c0 = arith.constant 0 : index
    %c0_0 = arith.constant 0 : index
    %c0_1 = arith.constant 0 : index
    %0 = vector.load %arg1[%c0, %c0_0, %c0_1] : memref<1x8x256xf32, #tpu.memory_space<vmem>>, vector<1x8x256xf32>
    %1 = vector.shape_cast %0 : vector<1x8x256xf32> to vector<8x256xf32>
    %c0_2 = arith.constant 0 : index
    %c0_3 = arith.constant 0 : index
    %2 = vector.load %arg3[%c0_2, %c0_3] : memref<8x8xf32, #tpu.memory_space<vmem>>, vector<8x8xf32>
    %3 = arith.truncf %2 : vector<8x8xf32> to vector<8x8xbf16>
    %4 = arith.truncf %1 : vector<8x256xf32> to vector<8x256xbf16>
    %cst = arith.constant dense<0.000000e+00> : vector<8x256xf32>
    %5 = tpu.matmul %3, %4, %cst {dimension_numbers = #tpu.dot_dimension_numbers<[1], [0], [0], [1], [0, 0, 1, 1], [], []>} : vector<8x8xbf16>, vector<8x256xbf16>, vector<8x256xf32> -> vector<8x256xf32>
    %c0_4 = arith.constant 0 : index
    %c0_5 = arith.constant 0 : index
    %6 = vector.load %arg4[%c0_4, %c0_5] : memref<8x1xf32, #tpu.memory_space<vmem>>, vector<8x1xf32>
    %7 = vector.broadcast %6 : vector<8x1xf32> to vector<8x256xf32>
    %8 = arith.addf %5, %7 : vector<8x256xf32>
    %cst_6 = arith.constant 5.000000e-01 : f32
    %9 = vector.broadcast %cst_6 : f32 to vector<8x256xf32>
    %10 = arith.mulf %9, %8 : vector<8x256xf32>
    %cst_7 = arith.constant 0.707106769 : f32
    %11 = vector.broadcast %cst_7 : f32 to vector<8x256xf32>
    %12 = arith.mulf %8, %11 : vector<8x256xf32>
    %13 = math.erf %12 : vector<8x256xf32>
    %cst_8 = arith.constant 1.000000e+00 : f32
    %14 = vector.broadcast %cst_8 : f32 to vector<8x256xf32>
    %15 = arith.addf %14, %13 : vector<8x256xf32>
    %16 = arith.mulf %10, %15 : vector<8x256xf32>
    %c0_9 = arith.constant 0 : index
    %c0_10 = arith.constant 0 : index
    %17 = vector.load %arg5[%c0_9, %c0_10] : memref<8x72xf32, #tpu.memory_space<vmem>>, vector<8x72xf32>
    %c0_11 = arith.constant 0 : index
    %c0_12 = arith.constant 0 : index
    %c0_13 = arith.constant 0 : index
    %18 = vector.load %arg2[%c0_11, %c0_12, %c0_13] : memref<1x1x72xf32, #tpu.memory_space<vmem>>, vector<1x1x72xf32>
    %19 = vector.shape_cast %18 : vector<1x1x72xf32> to vector<1x72xf32>
    %cst_14 = arith.constant 1.000000e+00 : f32
    %20 = vector.broadcast %cst_14 : f32 to vector<1x72xf32>
    %21 = arith.addf %19, %20 : vector<1x72xf32>
    %22 = vector.broadcast %21 : vector<1x72xf32> to vector<8x72xf32>
    %23 = arith.mulf %17, %22 : vector<8x72xf32>
    %24 = arith.mulf %23, %23 : vector<8x72xf32>
    %cst_15 = arith.constant dense<0.000000e+00> : vector<8xf32>
    %25 = vector.multi_reduction <add>, %24, %cst_15 [1] : vector<8x72xf32> to vector<8xf32>
    %26 = vector.shape_cast %25 : vector<8xf32> to vector<8x1xf32>
    %cst_16 = arith.constant 9.99999993E-9 : f32
    %27 = vector.broadcast %cst_16 : f32 to vector<8x1xf32>
    %28 = arith.addf %26, %27 : vector<8x1xf32>
    %29 = math.rsqrt %28 : vector<8x1xf32>
    %30 = vector.broadcast %29 : vector<8x1xf32> to vector<8x72xf32>
    %31 = arith.mulf %23, %30 : vector<8x72xf32>
    %cst_17 = arith.constant 0.000000e+00 : f32
    %32 = vector.broadcast %cst_17 : f32 to vector<8x128xf32>
    %33 = tpu.concatenate %32, %16, %32 in 1 : vector<8x128xf32>, vector<8x256xf32>, vector<8x128xf32> -> vector<8x512xf32>
    %34 = tpu.iota {dimensions = array<i32: 1>} : vector<1x256xi32>
    %c16_i32 = arith.constant 16 : i32
    %c0_i32 = arith.constant 0 : i32
    %35 = arith.cmpi eq, %c16_i32, %c0_i32 : i32
    %c1_i32 = arith.constant 1 : i32
    %36 = arith.select %35, %c1_i32, %c16_i32 : i32
    %37 = vector.broadcast %36 : i32 to vector<1x256xi32>
    %38 = arith.remsi %34, %37 : vector<1x256xi32>
    %c0_i32_18 = arith.constant 0 : i32
    %39 = vector.broadcast %c0_i32_18 : i32 to vector<1x256xi32>
    %40 = arith.cmpi ne, %38, %39 : vector<1x256xi32>
    %c0_i32_19 = arith.constant 0 : i32
    %41 = vector.broadcast %c0_i32_19 : i32 to vector<1x256xi32>
    %42 = arith.cmpi slt, %38, %41 : vector<1x256xi32>
    %c0_i32_20 = arith.constant 0 : i32
    %43 = arith.cmpi slt, %36, %c0_i32_20 : i32
    %44 = vector.broadcast %43 : i1 to vector<1x256xi1>
    %45 = vector.broadcast %44 : vector<1x256xi1> to vector<1x256xi1>
    %46 = arith.xori %42, %45 : vector<1x256xi1>
    %47 = arith.andi %46, %40 : vector<1x256xi1>
    %48 = vector.broadcast %36 : i32 to vector<1x256xi32>
    %49 = arith.addi %38, %48 : vector<1x256xi32>
    %50 = arith.select %47, %49, %38 : vector<1x256xi1>, vector<1x256xi32>
    %51 = vector.extract_strided_slice %33 {offsets = [0, 111], sizes = [8, 256], strides = [1, 1]} : vector<8x512xf32> to vector<8x256xf32>
    %c1_i32_21 = arith.constant 1 : i32
    %52 = vector.broadcast %c1_i32_21 : i32 to vector<1x256xi32>
    %53 = arith.cmpi sge, %50, %52 : vector<1x256xi32>
    %cst_22 = arith.constant 0.000000e+00 : f32
    %54 = vector.shape_cast %53 : vector<1x256xi1> to vector<1x256xi1>
    %55 = vector.broadcast %54 : vector<1x256xi1> to vector<8x256xi1>
    %56 = vector.broadcast %cst_22 : f32 to vector<8x256xf32>
    %57 = arith.select %55, %51, %56 : vector<8x256xi1>, vector<8x256xf32>
    %58 = vector.extract_strided_slice %33 {offsets = [0, 112], sizes = [8, 256], strides = [1, 1]} : vector<8x512xf32> to vector<8x256xf32>
    %59 = vector.extract_strided_slice %33 {offsets = [0, 113], sizes = [8, 256], strides = [1, 1]} : vector<8x512xf32> to vector<8x256xf32>
    %c14_i32 = arith.constant 14 : i32
    %60 = vector.broadcast %c14_i32 : i32 to vector<1x256xi32>
    %61 = arith.cmpi sle, %50, %60 : vector<1x256xi32>
    %cst_23 = arith.constant 0.000000e+00 : f32
    %62 = vector.shape_cast %61 : vector<1x256xi1> to vector<1x256xi1>
    %63 = vector.broadcast %62 : vector<1x256xi1> to vector<8x256xi1>
    %64 = vector.broadcast %cst_23 : f32 to vector<8x256xf32>
    %65 = arith.select %63, %59, %64 : vector<8x256xi1>, vector<8x256xf32>
    %66 = vector.extract_strided_slice %33 {offsets = [0, 127], sizes = [8, 256], strides = [1, 1]} : vector<8x512xf32> to vector<8x256xf32>
    %c1_i32_24 = arith.constant 1 : i32
    %67 = vector.broadcast %c1_i32_24 : i32 to vector<1x256xi32>
    %68 = arith.cmpi sge, %50, %67 : vector<1x256xi32>
    %cst_25 = arith.constant 0.000000e+00 : f32
    %69 = vector.shape_cast %68 : vector<1x256xi1> to vector<1x256xi1>
    %70 = vector.broadcast %69 : vector<1x256xi1> to vector<8x256xi1>
    %71 = vector.broadcast %cst_25 : f32 to vector<8x256xf32>
    %72 = arith.select %70, %66, %71 : vector<8x256xi1>, vector<8x256xf32>
    %73 = vector.extract_strided_slice %33 {offsets = [0, 128], sizes = [8, 256], strides = [1, 1]} : vector<8x512xf32> to vector<8x256xf32>
    %74 = vector.extract_strided_slice %33 {offsets = [0, 129], sizes = [8, 256], strides = [1, 1]} : vector<8x512xf32> to vector<8x256xf32>
    %c14_i32_26 = arith.constant 14 : i32
    %75 = vector.broadcast %c14_i32_26 : i32 to vector<1x256xi32>
    %76 = arith.cmpi sle, %50, %75 : vector<1x256xi32>
    %cst_27 = arith.constant 0.000000e+00 : f32
    %77 = vector.shape_cast %76 : vector<1x256xi1> to vector<1x256xi1>
    %78 = vector.broadcast %77 : vector<1x256xi1> to vector<8x256xi1>
    %79 = vector.broadcast %cst_27 : f32 to vector<8x256xf32>
    %80 = arith.select %78, %74, %79 : vector<8x256xi1>, vector<8x256xf32>
    %81 = vector.extract_strided_slice %33 {offsets = [0, 143], sizes = [8, 256], strides = [1, 1]} : vector<8x512xf32> to vector<8x256xf32>
    %c1_i32_28 = arith.constant 1 : i32
    %82 = vector.broadcast %c1_i32_28 : i32 to vector<1x256xi32>
    %83 = arith.cmpi sge, %50, %82 : vector<1x256xi32>
    %cst_29 = arith.constant 0.000000e+00 : f32
    %84 = vector.shape_cast %83 : vector<1x256xi1> to vector<1x256xi1>
    %85 = vector.broadcast %84 : vector<1x256xi1> to vector<8x256xi1>
    %86 = vector.broadcast %cst_29 : f32 to vector<8x256xf32>
    %87 = arith.select %85, %81, %86 : vector<8x256xi1>, vector<8x256xf32>
    %88 = vector.extract_strided_slice %33 {offsets = [0, 144], sizes = [8, 256], strides = [1, 1]} : vector<8x512xf32> to vector<8x256xf32>
    %89 = vector.extract_strided_slice %33 {offsets = [0, 145], sizes = [8, 256], strides = [1, 1]} : vector<8x512xf32> to vector<8x256xf32>
    %c14_i32_30 = arith.constant 14 : i32
    %90 = vector.broadcast %c14_i32_30 : i32 to vector<1x256xi32>
    %91 = arith.cmpi sle, %50, %90 : vector<1x256xi32>
    %cst_31 = arith.constant 0.000000e+00 : f32
    %92 = vector.shape_cast %91 : vector<1x256xi1> to vector<1x256xi1>
    %93 = vector.broadcast %92 : vector<1x256xi1> to vector<8x256xi1>
    %94 = vector.broadcast %cst_31 : f32 to vector<8x256xf32>
    %95 = arith.select %93, %89, %94 : vector<8x256xi1>, vector<8x256xf32>
    %96 = tpu.concatenate %57, %58, %65, %72, %73, %80, %87, %88, %95 in 0 : vector<8x256xf32>, vector<8x256xf32>, vector<8x256xf32>, vector<8x256xf32>, vector<8x256xf32>, vector<8x256xf32>, vector<8x256xf32>, vector<8x256xf32>, vector<8x256xf32> -> vector<72x256xf32>
    %97 = arith.truncf %31 : vector<8x72xf32> to vector<8x72xbf16>
    %98 = arith.truncf %96 : vector<72x256xf32> to vector<72x256xbf16>
    %cst_32 = arith.constant dense<0.000000e+00> : vector<8x256xf32>
    %99 = tpu.matmul %97, %98, %cst_32 {dimension_numbers = #tpu.dot_dimension_numbers<[1], [0], [0], [1], [0, 0, 1, 1], [], []>} : vector<8x72xbf16>, vector<72x256xbf16>, vector<8x256xf32> -> vector<8x256xf32>
    %c0_33 = arith.constant 0 : index
    %c0_34 = arith.constant 0 : index
    %100 = vector.load %arg6[%c0_33, %c0_34] : memref<8x8xf32, #tpu.memory_space<vmem>>, vector<8x8xf32>
    %101 = arith.truncf %100 : vector<8x8xf32> to vector<8x8xbf16>
    %102 = arith.truncf %99 : vector<8x256xf32> to vector<8x256xbf16>
    %cst_35 = arith.constant dense<0.000000e+00> : vector<8x256xf32>
    %103 = tpu.matmul %101, %102, %cst_35 {dimension_numbers = #tpu.dot_dimension_numbers<[1], [0], [0], [1], [0, 0, 1, 1], [], []>} : vector<8x8xbf16>, vector<8x256xbf16>, vector<8x256xf32> -> vector<8x256xf32>
    %c0_36 = arith.constant 0 : index
    %c0_37 = arith.constant 0 : index
    %104 = vector.load %arg7[%c0_36, %c0_37] : memref<8x1xf32, #tpu.memory_space<vmem>>, vector<8x1xf32>
    %105 = vector.broadcast %104 : vector<8x1xf32> to vector<8x256xf32>
    %106 = arith.addf %103, %105 : vector<8x256xf32>
    %c0_38 = arith.constant 0 : index
    %c0_39 = arith.constant 0 : index
    %c0_40 = arith.constant 0 : index
    %107 = vector.load %arg8[%c0_38, %c0_39, %c0_40] : memref<1x8x256xf32, #tpu.memory_space<vmem>>, vector<1x8x256xf32>
    %108 = vector.shape_cast %107 : vector<1x8x256xf32> to vector<8x256xf32>
    %109 = vector.shape_cast %106 : vector<8x256xf32> to vector<1x8x256xf32>
    tpu.vector_store %arg8[%c0_38, %c0_39, %c0_40], %109 {strides = array<i32>} : memref<1x8x256xf32, #tpu.memory_space<vmem>>, vector<1x8x256xf32>,
    return
  }
  func.func @transform_0(%arg0: i32) -> (i32, i32, i32) {
    %c0_i32 = arith.constant 0 : i32
    %c0_i32_0 = arith.constant 0 : i32
    %c0_i32_1 = arith.constant 0 : i32
    return %arg0, %c0_i32, %c0_i32_0 : i32, i32, i32
  }
  func.func @transform_1(%arg0: i32) -> (i32, i32, i32) {
    %c0_i32 = arith.constant 0 : i32
    %c0_i32_0 = arith.constant 0 : i32
    %c0_i32_1 = arith.constant 0 : i32
    return %arg0, %c0_i32, %c0_i32_0 : i32, i32, i32
  }
  func.func @transform_2(%arg0: i32) -> (i32, i32) {
    %c0_i32 = arith.constant 0 : i32
    %c0_i32_0 = arith.constant 0 : i32
    %c0_i32_1 = arith.constant 0 : i32
    return %c0_i32, %c0_i32_0 : i32, i32
  }
  func.func @transform_3(%arg0: i32) -> (i32, i32) {
    %c0_i32 = arith.constant 0 : i32
    %c0_i32_0 = arith.constant 0 : i32
    %c0_i32_1 = arith.constant 0 : i32
    return %c0_i32, %c0_i32_0 : i32, i32
  }
  func.func @transform_4(%arg0: i32) -> (i32, i32) {
    %c0_i32 = arith.constant 0 : i32
    %c0_i32_0 = arith.constant 0 : i32
    %c0_i32_1 = arith.constant 0 : i32
    return %c0_i32, %c0_i32_0 : i32, i32
  }
  func.func @transform_5(%arg0: i32) -> (i32, i32) {
    %c0_i32 = arith.constant 0 : i32
    %c0_i32_0 = arith.constant 0 : i32
    %c0_i32_1 = arith.constant 0 : i32
    return %c0_i32, %c0_i32_0 : i32, i32
  }
  func.func @transform_6(%arg0: i32) -> (i32, i32) {
    %c0_i32 = arith.constant 0 : i32
    %c0_i32_0 = arith.constant 0 : i32
    %c0_i32_1 = arith.constant 0 : i32
    return %c0_i32, %c0_i32_0 : i32, i32
  }
  func.func @transform_7(%arg0: i32) -> (i32, i32, i32) {
    %c0_i32 = arith.constant 0 : i32
    %c0_i32_0 = arith.constant 0 : i32
    %c0_i32_1 = arith.constant 0 : i32
    return %arg0, %c0_i32, %c0_i32_0 : i32, i32, i32
  }
}

</mosaic_0001>

<llo_original>
// kernel: scale_conv_vgroups_forward.1
$region0: #{scale_conv_vgroups_forward.1}
  #allocation0 [shape = 'u32[]', space=smem, size = 0x4, offset = 0x4, fixed_abs, tag = 'smem constant byte address 0x4 - core index']
  #allocation1 [shape = 'u32[72,128]{1,0:T(1,128)}', space=vmem, size = 0x9000, scoped, tag = 'internal scratch']
  %s0 = inlined_call_operand.vmem [shape: f32[2,8,256], index: 0, kind: input, shape index: {}]
  %s1 = inlined_call_operand.vmem [shape: f32[2,1,72], index: 1, kind: input, shape index: {}]
  %s2 = inlined_call_operand.vmem [shape: f32[8,8], index: 2, kind: input, shape index: {}]
  %s3 = inlined_call_operand.vmem [shape: f32[8,1], index: 3, kind: input, shape index: {}]
  %s4 = inlined_call_operand.vmem [shape: f32[8,72], index: 4, kind: input, shape index: {}]
  %s5 = inlined_call_operand.vmem [shape: f32[8,8], index: 5, kind: input, shape index: {}]
  %s6 = inlined_call_operand.vmem [shape: f32[8,1], index: 6, kind: input, shape index: {}]
  %s7 = inlined_call_operand.vmem [shape: f32[2,8,256], index: 7, kind: output, shape index: {}]
  %s8 = sld [smem:[#allocation0]]
  $region61: #{scale_conv_vgroups_forward.1} parent=0
    _
  %s10 = ssub.s32 1, %s8
  %s11 = scalar_select 0, %s10, %s8
  loop: start=0, step=1, limit=4
  $region2: #{scale_conv_vgroups_forward.1} parent=0 // loop_pre_header
    _
  $region3: #{scale_conv_vgroups_forward.1} parent=0 // loop_header
    %s13 = sphi 0, %s17
    %p14 = scmp.ge.s32.totalorder %s13, 4
    %s23 = sphi 0, %s25
    %s26 = sphi 0, %s23
    %s27 = sphi 0, %s26
    %s43 = sphi 0, %s27
    %s49 = sphi 0, %s51
    %s52 = sphi 0, %s49
    %s53 = sphi 0, %s52
    %s69 = sphi 0, %s53
    %s73 = sphi 0, %s73
    %s75 = sphi 0, %s73
    %s76 = sphi 0, %s75
    %s90 = sphi 0, %s76
    %s94 = sphi 0, %s94
    %s96 = sphi 0, %s94
    %s97 = sphi 0, %s96
    %s111 = sphi 0, %s97
    %s115 = sphi 0, %s115
    %s117 = sphi 0, %s115
    %s118 = sphi 0, %s117
    %s132 = sphi 0, %s118
    %s136 = sphi 0, %s136
    %s138 = sphi 0, %s136
    %s139 = sphi 0, %s138
    %s153 = sphi 0, %s139
    %s157 = sphi 0, %s157
    %s159 = sphi 0, %s157
    %s160 = sphi 0, %s159
    %s174 = sphi 0, %s160
    %s180 = sphi 0, %s182
    %s183 = sphi 0, %s180
    %s184 = sphi 0, %s183
    %s200 = sphi 0, %s184
  $region4: #{scale_conv_vgroups_forward.1} parent=0 // loop_header_branch
    %16 = sbr.rel (%p14) target = $region8
  $region5: #{scale_conv_vgroups_forward.1} parent=0 // loop_body
    %s18 = ssub.s32 %s13, 1
    %s19 = ssub.s32 %s13, 2
    %s20 = sadd.s32 %s13, 1
    %s21 = ssub.s32 %s13, %s20
    %p22 = scmp.eq.s32.totalorder %s21, 0
    %s24 = sadd.s32 %s23, 1
    %s25 = scalar_select %p22, %s23, %s24
    %p28 = pneg %p22
    %p29 = scmp.eq.s32.totalorder %s13, 1
    %p30 = por %p28, %p29
    %p31 = scmp.ne.s32.totalorder %s23, %s26
    %p32 = scmp.eq.s32.totalorder %s13, 0
    %p33 = por %p31, %p32
    %p34 = scmp.ne.s32.totalorder %s23, %s26
    %p35 = scmp.eq.s32.totalorder %s18, 1
    %p36 = por %p34, %p35
    %p37 = scmp.ne.s32.totalorder %s26, %s27
    %p38 = scmp.eq.s32.totalorder %s18, 0
    %p39 = por %p37, %p38
    %p40 = scmp.ne.s32.totalorder %s26, %s27
    %p41 = scmp.eq.s32.totalorder %s19, 1
    %p42 = por %p40, %p41
    %p44 = scmp.ne.s32.totalorder %s27, %s43
    %p45 = scmp.eq.s32.totalorder %s19, 0
    %p46 = por %p44, %p45
    %s47 = ssub.s32 %s13, %s20
    %p48 = scmp.eq.s32.totalorder %s47, 0
    %s50 = sadd.s32 %s49, 1
    %s51 = scalar_select %p48, %s49, %s50
    %p54 = pneg %p48
    %p55 = scmp.eq.s32.totalorder %s13, 1
    %p56 = por %p54, %p55
    %p57 = scmp.ne.s32.totalorder %s49, %s52
    %p58 = scmp.eq.s32.totalorder %s13, 0
    %p59 = por %p57, %p58
    %p60 = scmp.ne.s32.totalorder %s49, %s52
    %p61 = scmp.eq.s32.totalorder %s18, 1
    %p62 = por %p60, %p61
    %p63 = scmp.ne.s32.totalorder %s52, %s53
    %p64 = scmp.eq.s32.totalorder %s18, 0
    %p65 = por %p63, %p64
    %p66 = scmp.ne.s32.totalorder %s52, %s53
    %p67 = scmp.eq.s32.totalorder %s19, 1
    %p68 = por %p66, %p67
    %p70 = scmp.ne.s32.totalorder %s53, %s69
    %p71 = scmp.eq.s32.totalorder %s19, 0
    %p72 = por %p70, %p71
    %s74 = sadd.s32 %s73, 1
    %p77 = scmp.eq.s32.totalorder %s13, 1
    %p78 = scmp.ne.s32.totalorder %s73, %s75
    %p79 = scmp.eq.s32.totalorder %s13, 0
    %p80 = por %p78, %p79
    %p81 = scmp.ne.s32.totalorder %s73, %s75
    %p82 = scmp.eq.s32.totalorder %s18, 1
    %p83 = por %p81, %p82
    %p84 = scmp.ne.s32.totalorder %s75, %s76
    %p85 = scmp.eq.s32.totalorder %s18, 0
    %p86 = por %p84, %p85
    %p87 = scmp.ne.s32.totalorder %s75, %s76
    %p88 = scmp.eq.s32.totalorder %s19, 1
    %p89 = por %p87, %p88
    %p91 = scmp.ne.s32.totalorder %s76, %s90
    %p92 = scmp.eq.s32.totalorder %s19, 0
    %p93 = por %p91, %p92
    %s95 = sadd.s32 %s94, 1
    %p98 = scmp.eq.s32.totalorder %s13, 1
    %p99 = scmp.ne.s32.totalorder %s94, %s96
    %p100 = scmp.eq.s32.totalorder %s13, 0
    %p101 = por %p99, %p100
    %p102 = scmp.ne.s32.totalorder %s94, %s96
    %p103 = scmp.eq.s32.totalorder %s18, 1
    %p104 = por %p102, %p103
    %p105 = scmp.ne.s32.totalorder %s96, %s97
    %p106 = scmp.eq.s32.totalorder %s18, 0
    %p107 = por %p105, %p106
    %p108 = scmp.ne.s32.totalorder %s96, %s97
    %p109 = scmp.eq.s32.totalorder %s19, 1
    %p110 = por %p108, %p109
    %p112 = scmp.ne.s32.totalorder %s97, %s111
    %p113 = scmp.eq.s32.totalorder %s19, 0
    %p114 = por %p112, %p113
    %s116 = sadd.s32 %s115, 1
    %p119 = scmp.eq.s32.totalorder %s13, 1
    %p120 = scmp.ne.s32.totalorder %s115, %s117
    %p121 = scmp.eq.s32.totalorder %s13, 0
    %p122 = por %p120, %p121
    %p123 = scmp.ne.s32.totalorder %s115, %s117
    %p124 = scmp.eq.s32.totalorder %s18, 1
    %p125 = por %p123, %p124
    %p126 = scmp.ne.s32.totalorder %s117, %s118
    %p127 = scmp.eq.s32.totalorder %s18, 0
    %p128 = por %p126, %p127
    %p129 = scmp.ne.s32.totalorder %s117, %s118
    %p130 = scmp.eq.s32.totalorder %s19, 1
    %p131 = por %p129, %p130
    %p133 = scmp.ne.s32.totalorder %s118, %s132
    %p134 = scmp.eq.s32.totalorder %s19, 0
    %p135 = por %p133, %p134
    %s137 = sadd.s32 %s136, 1
    %p140 = scmp.eq.s32.totalorder %s13, 1
    %p141 = scmp.ne.s32.totalorder %s136, %s138
    %p142 = scmp.eq.s32.totalorder %s13, 0
    %p143 = por %p141, %p142
    %p144 = scmp.ne.s32.totalorder %s136, %s138
    %p145 = scmp.eq.s32.totalorder %s18, 1
    %p146 = por %p144, %p145
    %p147 = scmp.ne.s32.totalorder %s138, %s139
    %p148 = scmp.eq.s32.totalorder %s18, 0
    %p149 = por %p147, %p148
    %p150 = scmp.ne.s32.totalorder %s138, %s139
    %p151 = scmp.eq.s32.totalorder %s19, 1
    %p152 = por %p150, %p151
    %p154 = scmp.ne.s32.totalorder %s139, %s153
    %p155 = scmp.eq.s32.totalorder %s19, 0
    %p156 = por %p154, %p155
    %s158 = sadd.s32 %s157, 1
    %p161 = scmp.eq.s32.totalorder %s13, 1
    %p162 = scmp.ne.s32.totalorder %s157, %s159
    %p163 = scmp.eq.s32.totalorder %s13, 0
    %p164 = por %p162, %p163
    %p165 = scmp.ne.s32.totalorder %s157, %s159
    %p166 = scmp.eq.s32.totalorder %s18, 1
    %p167 = por %p165, %p166
    %p168 = scmp.ne.s32.totalorder %s159, %s160
    %p169 = scmp.eq.s32.totalorder %s18, 0
    %p170 = por %p168, %p169
    %p171 = scmp.ne.s32.totalorder %s159, %s160
    %p172 = scmp.eq.s32.totalorder %s19, 1
    %p173 = por %p171, %p172
    %p175 = scmp.ne.s32.totalorder %s160, %s174
    %p176 = scmp.eq.s32.totalorder %s19, 0
    %p177 = por %p175, %p176
    %s178 = ssub.s32 %s13, %s20
    %p179 = scmp.eq.s32.totalorder %s178, 0
    %s181 = sadd.s32 %s180, 1
    %s182 = scalar_select %p179, %s180, %s181
    %p185 = pneg %p179
    %p186 = scmp.eq.s32.totalorder %s13, 1
    %p187 = por %p185, %p186
    %p188 = scmp.ne.s32.totalorder %s180, %s183
    %p189 = scmp.eq.s32.totalorder %s13, 0
    %p190 = por %p188, %p189
    %p191 = scmp.ne.s32.totalorder %s180, %s183
    %p192 = scmp.eq.s32.totalorder %s18, 1
    %p193 = por %p191, %p192
    %p194 = scmp.ne.s32.totalorder %s183, %s184
    %p195 = scmp.eq.s32.totalorder %s18, 0
    %p196 = por %p194, %p195
    %p197 = scmp.ne.s32.totalorder %s183, %s184
    %p198 = scmp.eq.s32.totalorder %s19, 1
    %p199 = por %p197, %p198
    %p201 = scmp.ne.s32.totalorder %s184, %s200
    %p202 = scmp.eq.s32.totalorder %s19, 0
    %p203 = por %p201, %p202
    %p204 = scmp.le.s32.totalorder 1, %s13
    %p205 = scmp.lt.s32.totalorder %s13, 3
    %p206 = pnand %p204, %p205
    %p207 = pneg %p206
    // Predicated region
    $region9: #{scale_conv_vgroups_forward.1} parent=5 // pred_check
      _
    $region10: #{scale_conv_vgroups_forward.1} parent=5 // pred_check_branch
      %209 = sbr.rel (%p206) target = $region12
    $region11: #{scale_conv_vgroups_forward.1} parent=5 // pred_region
      %s210 = ssub.s32 %s13, 1
      // Predicated region
      $region13: #{scale_conv_vgroups_forward.1} parent=11 // pred_check
        %p211 = pneg %p86
      $region14: #{scale_conv_vgroups_forward.1} parent=11 // pred_check_branch
        %213 = sbr.rel (%p211) target = $region16
      $region15: #{scale_conv_vgroups_forward.1} parent=11 // pred_region
        _
      $region16: #{scale_conv_vgroups_forward.1} parent=11 // pred_fallthru
        _
      // Predicated region
      $region17: #{scale_conv_vgroups_forward.1} parent=11 // pred_check
        %p214 = pneg %p107
      $region18: #{scale_conv_vgroups_forward.1} parent=11 // pred_check_branch
        %216 = sbr.rel (%p214) target = $region20
      $region19: #{scale_conv_vgroups_forward.1} parent=11 // pred_region
        _
      $region20: #{scale_conv_vgroups_forward.1} parent=11 // pred_fallthru
        _
      // Predicated region
      $region21: #{scale_conv_vgroups_forward.1} parent=11 // pred_check
        %p217 = pneg %p128
      $region22: #{scale_conv_vgroups_forward.1} parent=11 // pred_check_branch
        %219 = sbr.rel (%p217) target = $region24
      $region23: #{scale_conv_vgroups_forward.1} parent=11 // pred_region
        _
      $region24: #{scale_conv_vgroups_forward.1} parent=11 // pred_fallthru
        _
      // Predicated region
      $region25: #{scale_conv_vgroups_forward.1} parent=11 // pred_check
        %p220 = pneg %p149
      $region26: #{scale_conv_vgroups_forward.1} parent=11 // pred_check_branch
        %222 = sbr.rel (%p220) target = $region28
      $region27: #{scale_conv_vgroups_forward.1} parent=11 // pred_region
        _
      $region28: #{scale_conv_vgroups_forward.1} parent=11 // pred_fallthru
        _
      // Predicated region
      $region29: #{scale_conv_vgroups_forward.1} parent=11 // pred_check
        %p223 = pneg %p170
      $region30: #{scale_conv_vgroups_forward.1} parent=11 // pred_check_branch
        %225 = sbr.rel (%p223) target = $region32
      $region31: #{scale_conv_vgroups_forward.1} parent=11 // pred_region
        _
      $region32: #{scale_conv_vgroups_forward.1} parent=11 // pred_fallthru
        _
    $region12: #{scale_conv_vgroups_forward.1} parent=5 // pred_fallthru
      _
    %p226 = scmp.lt.s32.totalorder %s13, 2
    // Predicated region
    $region33: #{scale_conv_vgroups_forward.1} parent=5 // pred_check
      %p227 = pneg %p226
    $region34: #{scale_conv_vgroups_forward.1} parent=5 // pred_check_branch
      %229 = sbr.rel (%p227) target = $region36
    $region35: #{scale_conv_vgroups_forward.1} parent=5 // pred_region
      // Predicated region
      $region37: #{scale_conv_vgroups_forward.1} parent=35 // pred_check
        %p230 = pneg %p33
      $region38: #{scale_conv_vgroups_forward.1} parent=35 // pred_check_branch
        %232 = sbr.rel (%p230) target = $region40
      $region39: #{scale_conv_vgroups_forward.1} parent=35 // pred_region
        %p233 = scmp.lt.s32.totalorder %s13, 1
        %s234 = scalar_select %p233, %s13, 1
        %s235 = smul.addr %s234, 2
        %s236 = smul.addr %s235, 8
        %s237 = scalar_lea.vmem %s0, %s236
      $region40: #{scale_conv_vgroups_forward.1} parent=35 // pred_fallthru
        _
      // Predicated region
      $region41: #{scale_conv_vgroups_forward.1} parent=35 // pred_check
        %p238 = pneg %p59
      $region42: #{scale_conv_vgroups_forward.1} parent=35 // pred_check_branch
        %240 = sbr.rel (%p238) target = $region44
      $region43: #{scale_conv_vgroups_forward.1} parent=35 // pred_region
        %p241 = scmp.lt.s32.totalorder %s13, 1
        %s242 = scalar_select %p241, %s13, 1
        %s243 = scalar_lea.vmem %s1, %s242
      $region44: #{scale_conv_vgroups_forward.1} parent=35 // pred_fallthru
        _
    $region36: #{scale_conv_vgroups_forward.1} parent=5 // pred_fallthru
      _
    %p244 = scmp.le.s32.totalorder 1, %s13
    %p245 = scmp.lt.s32.totalorder %s13, 3
    %p246 = pnand %p244, %p245
    %p247 = pneg %p246
    // Predicated region
    $region45: #{scale_conv_vgroups_forward.1} parent=5 // pred_check
      _
    $region46: #{scale_conv_vgroups_forward.1} parent=5 // pred_check_branch
      %249 = sbr.rel (%p246) target = $region48
    $region47: #{scale_conv_vgroups_forward.1} parent=5 // pred_region
      %s250 = ssub.s32 %s13, 1
      %p251 = scmp.lt.s32.totalorder %s18, 1
      %s252 = scalar_select %p251, %s18, 1
      %s253 = smul.addr %s252, 2
      %s254 = smul.addr %s253, 8
      %s255 = scalar_lea.vmem %s0, %s254
      %p256 = pneg %p39
      %p257 = pneg %p36
      %p258 = scmp.lt.s32.totalorder %s18, 1
      %s259 = scalar_select %p258, %s18, 1
      %s260 = scalar_lea.vmem %s1, %s259
      %p261 = pneg %p65
      %p262 = pneg %p62
      %p263 = pneg %p86
      %p264 = pneg %p83
      %p265 = pneg %p107
      %p266 = pneg %p104
      %p267 = pneg %p128
      %p268 = pneg %p125
      %p269 = pneg %p149
      %p270 = pneg %p146
      %p271 = pneg %p170
      %p272 = pneg %p167
      %p273 = pneg %p196
      %p274 = pneg %p193
      %p275 = scmp.lt.s32.totalorder %s18, 1
      %s276 = scalar_select %p275, %s18, 1
      %s277 = smul.addr %s276, 2
      %s278 = smul.addr %s277, 8
      %s279 = scalar_lea.vmem %s7, %s278
      %p280 = scmp.lt.s32.totalorder %s18, 1
      %s281 = scalar_select %p280, %s18, 1
      %s282 = smul.addr %s281, 2
      %s283 = smul.addr %s282, 8
      %s284 = scalar_lea.vmem %s0, %s283
      %p285 = scmp.lt.s32.totalorder %s18, 1
      %s286 = scalar_select %p285, %s18, 1
      %s287 = scalar_lea.vmem %s1, %s286
      %p288 = scmp.lt.s32.totalorder %s18, 1
      %s289 = scalar_select %p288, %s18, 1
      %s290 = smul.addr %s289, 2
      %s291 = smul.addr %s290, 8
      %s292 = scalar_lea.vmem %s7, %s291
      %v294 = vld [vmem:[%s284] sm:$0xff]
      %v295 = vld [vmem:[%s284 + $0x8] sm:$0xff]
      %v296 = vld [vmem:[%s2] sm:$0xff]
      %v297 = vpack.c.bf16 %v296, %v296
      %v298 = vpack.c.bf16 %v294, %v294
      %v299 = vpack.c.bf16 %v295, %v295
      %v300 = vld [vmem:[%s3] sm:$0xff]
      %302 = vset.pattern.permute.xlu0 0
      %303 = vperm.xlu0 %302, %v300
      %v304 = vpop.permute.xlu0 %303
      %vm306 = vcmask 64512
      %v308 = vsel %vm306, %v297, 0
      %vm310 = vcmask 1043456
      %v312 = vsel %vm310, %v298, 0
      %v315 = vsel %vm310, %v299, 0
      %317 = vmatpush.bf16.msra.mxu0 0
      %318 = vmatpush.bf16.msra.mxu0 0
      %319 = vmatpush.bf16.msra.mxu0 0
      %320 = vmatpush.bf16.msra.mxu0 0
      %321 = vmatpush.bf16.msra.mxu0 0
      %322 = vmatpush.bf16.msra.mxu0 0
      %323 = vmatpush.bf16.msra.mxu0 0
      %324 = vmatpush.bf16.msra.mxu0 %v312
      %325 = vmatmul.bf16.gmra.mxu0 %v308
      %v326 = vpop.f32.mrf.mxu0
      %v327 = vadd.f32 %v304, %v326
      %v328 = vpop.f32.mrf.mxu0
      %329 = vdwg.mxu0
      %330 = vmatpush.bf16.msra.mxu0 0
      %331 = vmatpush.bf16.msra.mxu0 0
      %332 = vmatpush.bf16.msra.mxu0 0
      %333 = vmatpush.bf16.msra.mxu0 0
      %334 = vmatpush.bf16.msra.mxu0 0
      %335 = vmatpush.bf16.msra.mxu0 0
      %336 = vmatpush.bf16.msra.mxu0 0
      %337 = vmatpush.bf16.msra.mxu0 %v315
      %338 = vmatmul.bf16.gmra.mxu0 %v308
      %v339 = vpop.f32.mrf.mxu0
      %v340 = vadd.f32 %v304, %v339
      %v341 = vpop.f32.mrf.mxu0
      %342 = vdwg.mxu0
      %v343 = vmul.f32 %v327, 0.5
      %v344 = vmul.f32 %v340, 0.5
      %v345 = vmul.f32 %v327, 0.70710677
      %v346 = vmul.f32 %v340, 0.70710677
      %v347 = vmul.f32 %v345, %v345
      %v348 = vmin.f32 16.0, %v347
      %v349 = vmul.f32 %v348, 2.1237322e-06
      %v350 = vadd.f32 %v349, 0.00028619796
      %v351 = vmul.f32 %v348, %v350
      %v352 = vadd.f32 %v351, 0.0036580483
      %v353 = vmul.f32 %v348, %v352
      %v354 = vadd.f32 %v353, 0.05243302
      %v355 = vmul.f32 %v348, %v354
      %v356 = vadd.f32 %v355, 0.18741608
      %v357 = vmul.f32 %v348, %v356
      %v358 = vadd.f32 %v357, 1.1283791
      %v359 = vmul.f32 %v345, %v358
      %v360 = vmul.f32 %v348, 3.8918573e-05
      %v361 = vadd.f32 %v360, 0.001143296
      %v362 = vmul.f32 %v348, %v361
      %v363 = vadd.f32 %v362, 0.014752088
      %v364 = vmul.f32 %v348, %v363
      %v365 = vadd.f32 %v364, 0.112945676
      %v366 = vmul.f32 %v348, %v365
      %v367 = vadd.f32 %v366, 0.4994258
      %v368 = vmul.f32 %v348, %v367
      %v369 = vadd.f32 %v368, 1.0
      %v370 = vrcp.pop %v369
      %v371 = vmul.f32 %v369, %v370
      %v372 = vsub.f32 1.0, %v371
      %v373 = vmul.f32 %v370, %v372
      %v374 = vadd.f32 %v370, %v373
      %vm375 = vweird.f32 %v369
      %vm376 = vweird.f32 %v370
      %vm377 = vmor %vm375, %vm376
      %v378 = vsel %vm377, %v370, %v374
      %v379 = vand.u32 2147483647, %v369
      %vm380 = vcmp.eq.f32.partialorder %v379, 8.507059e+37
      %v381 = vand.u32 %v369, 2147483648
      %v382 = vor.u32 1.1754944e-38, %v381
      %v383 = vsel %vm380, %v382, %v378
      %v384 = vmul.f32 %v359, %v383
      %v385 = vmin.f32 %v384, 1.0
      %v386 = vmax.f32 %v385, -1.0
      %v387 = vmul.f32 %v346, %v346
      %v388 = vmin.f32 16.0, %v387
      %v389 = vmul.f32 %v388, 2.1237322e-06
      %v390 = vadd.f32 %v389, 0.00028619796
      %v391 = vmul.f32 %v388, %v390
      %v392 = vadd.f32 %v391, 0.0036580483
      %v393 = vmul.f32 %v388, %v392
      %v394 = vadd.f32 %v393, 0.05243302
      %v395 = vmul.f32 %v388, %v394
      %v396 = vadd.f32 %v395, 0.18741608
      %v397 = vmul.f32 %v388, %v396
      %v398 = vadd.f32 %v397, 1.1283791
      %v399 = vmul.f32 %v346, %v398
      %v400 = vmul.f32 %v388, 3.8918573e-05
      %v401 = vadd.f32 %v400, 0.001143296
      %v402 = vmul.f32 %v388, %v401
      %v403 = vadd.f32 %v402, 0.014752088
      %v404 = vmul.f32 %v388, %v403
      %v405 = vadd.f32 %v404, 0.112945676
      %v406 = vmul.f32 %v388, %v405
      %v407 = vadd.f32 %v406, 0.4994258
      %v408 = vmul.f32 %v388, %v407
      %v409 = vadd.f32 %v408, 1.0
      %v410 = vrcp.pop %v409
      %v411 = vmul.f32 %v409, %v410
      %v412 = vsub.f32 1.0, %v411
      %v413 = vmul.f32 %v410, %v412
      %v414 = vadd.f32 %v410, %v413
      %vm415 = vweird.f32 %v409
      %vm416 = vweird.f32 %v410
      %vm417 = vmor %vm415, %vm416
      %v418 = vsel %vm417, %v410, %v414
      %v419 = vand.u32 2147483647, %v409
      %vm420 = vcmp.eq.f32.partialorder %v419, 8.507059e+37
      %v421 = vand.u32 %v409, 2147483648
      %v422 = vor.u32 1.1754944e-38, %v421
      %v423 = vsel %vm420, %v422, %v418
      %v424 = vmul.f32 %v399, %v423
      %v425 = vmin.f32 %v424, 1.0
      %v426 = vmax.f32 %v425, -1.0
      %v427 = vadd.f32 %v386, 1.0
      %v428 = vadd.f32 %v426, 1.0
      %v429 = vmul.f32 %v343, %v427
      %v430 = vmul.f32 %v344, %v428
      %v431 = vld [vmem:[%s4] sm:$0xff]
      %v432 = vld [vmem:[%s287] sm:$0x1]
      %v433 = vadd.f32 %v432, 1.0
      %v435 = vperm.slane %v433, 0
      %v437 = vmul.f32 %v431, %v435
      %v438 = vmul.f32 %v437, %v437
      %vm439 = vcmask 588800
      %v440 = vsel %vm439, %v438, 0.0
      %441 = vadd.xlane.f32.xlu0 %v440
      %v442 = vpop.xlane.xlu0 %441
      %v443 = vadd.f32 %v442, 1e-08
      %v444 = vrsqrt.pop %v443
      %v445 = vmul.f32 %v444, %v443
      %v446 = vmul.f32 %v445, %v444
      %v447 = vmul.f32 0.5, %v446
      %v448 = vsub.f32 1.5, %v447
      %v449 = vmul.f32 %v444, %v448
      %vm450 = vweird.f32 %v443
      %vm451 = vweird.f32 %v444
      %vm452 = vmor %vm450, %vm451
      %v453 = vsel %vm452, %v444, %v449
      %v454 = vmul.f32 %v437, %v453
      %v455 = vlaneseq
      %v456 = vand.u32 %v455, 127
      %v457 = vadd.s32 %v456, 128
      %vm458 = vcmp.lt.s32.totalorder %v456, 0
      %v459 = vsub.s32 0, %v456
      %v460 = vsel %vm458, %v459, %v456
      %v461 = vshrl.u32 %v460, 4
      %v462 = vand.u32 %v460, 15
      %v463 = vsub.s32 0, %v462
      %v464 = vsel %vm458, %v463, %v462
      %vm465 = vcmp.lt.s32.totalorder %v457, 0
      %v466 = vsub.s32 0, %v457
      %v467 = vsel %vm465, %v466, %v457
      %v468 = vshrl.u32 %v467, 4
      %v469 = vand.u32 %v467, 15
      %v470 = vsub.s32 0, %v469
      %v471 = vsel %vm465, %v470, %v469
      %vm472 = vcmp.ne.s32.totalorder %v464, 0
      %vm473 = vcmp.ne.s32.totalorder %v471, 0
      %vm474 = vcmp.lt.s32.totalorder %v464, 0
      %vm475 = vcmp.lt.s32.totalorder %v471, 0
      %vm476 = vmand %vm474, %vm472
      %vm477 = vmand %vm475, %vm473
      %v478 = vadd.s32 %v464, 16
      %v479 = vadd.s32 %v471, 16
      %v480 = vsel %vm476, %v478, %v464
      %v481 = vsel %vm477, %v479, %v471
      %vm482 = vcmp.ge.s32.totalorder %v480, 1
      %vm483 = vcmp.ge.s32.totalorder %v481, 1
      %v484 = vsel %vm482, 1, 0
      %v485 = vsel %vm483, 1, 0
      %vm486 = vcmp.eq.s32.totalorder %v484, 1
      %vm487 = vcmp.eq.s32.totalorder %v485, 1
      %491 = vrot.lane.b32.xlu0 0.0, 17
      %v492 = vpop.permute.xlu0 %491
      %493 = vrot.lane.b32.xlu0 %v429, 17
      %v494 = vpop.permute.xlu0 %493
      %495 = vrot.lane.b32.xlu0 %v430, 17
      %v496 = vpop.permute.xlu0 %495
      %vm497 = vcmask 138240
      %v498 = vsel %vm497, %v492, %v494
      %v499 = vsel %vm497, %v494, %v496
      %v502 = vsel %vm486, %v498, 0.0
      %v503 = vsel %vm487, %v499, 0.0
      %vm504 = vcmp.le.s32.totalorder %v480, 14
      %vm505 = vcmp.le.s32.totalorder %v481, 14
      %v506 = vsel %vm504, 1, 0
      %v507 = vsel %vm505, 1, 0
      %vm508 = vcmp.eq.s32.totalorder %v506, 1
      %vm509 = vcmp.eq.s32.totalorder %v507, 1
      %510 = vrot.lane.b32.xlu0 0.0, 15
      %v511 = vpop.permute.xlu0 %510
      %512 = vrot.lane.b32.xlu0 %v429, 15
      %v513 = vpop.permute.xlu0 %512
      %514 = vrot.lane.b32.xlu0 %v430, 15
      %v515 = vpop.permute.xlu0 %514
      %vm516 = vcmask 121856
      %v517 = vsel %vm516, %v511, %v513
      %v518 = vsel %vm516, %v513, %v515
      %v521 = vsel %vm508, %v517, 0.0
      %v522 = vsel %vm509, %v518, 0.0
      %523 = vrot.lane.b32.xlu0 0.0, 1
      %v524 = vpop.permute.xlu0 %523
      %525 = vrot.lane.b32.xlu0 %v429, 1
      %v526 = vpop.permute.xlu0 %525
      %527 = vrot.lane.b32.xlu0 %v430, 1
      %v528 = vpop.permute.xlu0 %527
      %vm529 = vcmask 7168
      %v530 = vsel %vm529, %v524, %v526
      %v531 = vsel %vm529, %v526, %v528
      %v534 = vsel %vm486, %v530, 0.0
      %v535 = vsel %vm487, %v531, 0.0
      %536 = vrot.lane.b32.xlu0 %v429, 127
      %v537 = vpop.permute.xlu0 %536
      %538 = vrot.lane.b32.xlu0 %v430, 127
      %v539 = vpop.permute.xlu0 %538
      %540 = vrot.lane.b32.xlu0 0.0, 127
      %v541 = vpop.permute.xlu0 %540
      %vm542 = vcmask 1039360
      %v543 = vsel %vm542, %v537, %v539
      %v544 = vsel %vm542, %v539, %v541
      %v547 = vsel %vm508, %v543, 0.0
      %v548 = vsel %vm509, %v544, 0.0
      %549 = vrot.lane.b32.xlu0 %v429, 113
      %v550 = vpop.permute.xlu0 %549
      %551 = vrot.lane.b32.xlu0 %v430, 113
      %v552 = vpop.permute.xlu0 %551
      %553 = vrot.lane.b32.xlu0 0.0, 113
      %v554 = vpop.permute.xlu0 %553
      %vm555 = vcmask 924672
      %v556 = vsel %vm555, %v550, %v552
      %v557 = vsel %vm555, %v552, %v554
      %v560 = vsel %vm486, %v556, 0.0
      %v561 = vsel %vm487, %v557, 0.0
      %562 = vrot.lane.b32.xlu0 %v429, 111
      %v563 = vpop.permute.xlu0 %562
      %564 = vrot.lane.b32.xlu0 %v430, 111
      %v565 = vpop.permute.xlu0 %564
      %566 = vrot.lane.b32.xlu0 0.0, 111
      %v567 = vpop.permute.xlu0 %566
      %vm568 = vcmask 908288
      %v569 = vsel %vm568, %v563, %v565
      %v570 = vsel %vm568, %v565, %v567
      %v573 = vsel %vm508, %v569, 0.0
      %v574 = vsel %vm509, %v570, 0.0
      %575 = vrot.lane.b32.xlu0 0.0, 16
      %v576 = vpop.permute.xlu0 %575
      %577 = vrot.lane.b32.xlu0 %v429, 16
      %v578 = vpop.permute.xlu0 %577
      %579 = vrot.lane.b32.xlu0 %v430, 16
      %v580 = vpop.permute.xlu0 %579
      %vm581 = vcmask 130048
      %v582 = vsel %vm581, %v576, %v578
      %v583 = vsel %vm581, %v578, %v580
      %586 = vrot.lane.b32.xlu0 %v429, 112
      %v587 = vpop.permute.xlu0 %586
      %588 = vrot.lane.b32.xlu0 %v430, 112
      %v589 = vpop.permute.xlu0 %588
      %590 = vrot.lane.b32.xlu0 0.0, 112
      %v591 = vpop.permute.xlu0 %590
      %vm592 = vcmask 916480
      %v593 = vsel %vm592, %v587, %v589
      %v594 = vsel %vm592, %v589, %v591
      %v597 = vpack.c.bf16 %v454, %v454
      %v598 = vpack.c.bf16 %v582, %v502
      %v599 = vpack.c.bf16 %v583, %v503
      %v600 = vpack.c.bf16 %v534, %v521
      %v601 = vpack.c.bf16 %v535, %v522
      %v602 = vpack.c.bf16 %v547, %v429
      %v603 = vpack.c.bf16 %v548, %v430
      %v604 = vpack.c.bf16 %v593, %v560
      %v605 = vpack.c.bf16 %v594, %v561
      %v606 = vpack.c.bf16 %v573, %v573
      %v607 = vpack.c.bf16 %v574, %v574
      %v609 = vsel %vm439, %v597, 0
      %v612 = vsel %vm310, %v606, 0
      %v615 = vsel %vm310, %v607, 0
      %617 = vmatpush.bf16.msra.mxu0 0
      %618 = vmatpush.bf16.msra.mxu0 0
      %619 = vmatpush.bf16.msra.mxu0 0
      %620 = vmatpush.bf16.msra.mxu0 %v612
      %621 = vmatpush.bf16.msra.mxu0 %v604
      %622 = vmatpush.bf16.msra.mxu0 %v602
      %623 = vmatpush.bf16.msra.mxu0 %v600
      %624 = vmatpush.bf16.msra.mxu0 %v598
      %625 = vmatmul.bf16.gmra.mxu0 %v609
      %v626 = vpop.f32.mrf.mxu0
      %v627 = vadd.f32 0.0, %v626
      %v628 = vpop.f32.mrf.mxu0
      %629 = vdwg.mxu0
      %630 = vmatpush.bf16.msra.mxu0 0
      %631 = vmatpush.bf16.msra.mxu0 0
      %632 = vmatpush.bf16.msra.mxu0 0
      %633 = vmatpush.bf16.msra.mxu0 %v615
      %634 = vmatpush.bf16.msra.mxu0 %v605
      %635 = vmatpush.bf16.msra.mxu0 %v603
      %636 = vmatpush.bf16.msra.mxu0 %v601
      %637 = vmatpush.bf16.msra.mxu0 %v599
      %638 = vmatmul.bf16.gmra.mxu0 %v609
      %v639 = vpop.f32.mrf.mxu0
      %v640 = vadd.f32 0.0, %v639
      %v641 = vpop.f32.mrf.mxu0
      %642 = vdwg.mxu0
      %v643 = vld [vmem:[%s5] sm:$0xff]
      %v644 = vpack.c.bf16 %v643, %v643
      %v645 = vpack.c.bf16 %v627, %v627
      %v646 = vpack.c.bf16 %v640, %v640
      %v647 = vld [vmem:[%s6] sm:$0xff]
      %649 = vset.pattern.permute.xlu0 0
      %650 = vperm.xlu0 %649, %v647
      %v651 = vpop.permute.xlu0 %650
      %v654 = vsel %vm306, %v644, 0
      %v657 = vsel %vm310, %v645, 0
      %v660 = vsel %vm310, %v646, 0
      %662 = vmatpush.bf16.msra.mxu0 0
      %663 = vmatpush.bf16.msra.mxu0 0
      %664 = vmatpush.bf16.msra.mxu0 0
      %665 = vmatpush.bf16.msra.mxu0 0
      %666 = vmatpush.bf16.msra.mxu0 0
      %667 = vmatpush.bf16.msra.mxu0 0
      %668 = vmatpush.bf16.msra.mxu0 0
      %669 = vmatpush.bf16.msra.mxu0 %v657
      %670 = vmatmul.bf16.gmra.mxu0 %v654
      %v671 = vpop.f32.mrf.mxu0
      %v672 = vadd.f32 %v651, %v671
      %v673 = vpop.f32.mrf.mxu0
      %674 = vdwg.mxu0
      %675 = vmatpush.bf16.msra.mxu0 0
      %676 = vmatpush.bf16.msra.mxu0 0
      %677 = vmatpush.bf16.msra.mxu0 0
      %678 = vmatpush.bf16.msra.mxu0 0
      %679 = vmatpush.bf16.msra.mxu0 0
      %680 = vmatpush.bf16.msra.mxu0 0
      %681 = vmatpush.bf16.msra.mxu0 0
      %682 = vmatpush.bf16.msra.mxu0 %v660
      %683 = vmatmul.bf16.gmra.mxu0 %v654
      %v684 = vpop.f32.mrf.mxu0
      %v685 = vadd.f32 %v651, %v684
      %v686 = vpop.f32.mrf.mxu0
      %687 = vdwg.mxu0
      %688 = vst [vmem:[%s292] sm:$0xff] %v672
      %689 = vst [vmem:[%s292 + $0x8] sm:$0xff] %v685
      %p690 = scmp.lt.s32.totalorder %s18, 1
      %s691 = scalar_select %p690, %s18, 1
      %s692 = smul.addr %s691, 2
      %s693 = smul.addr %s692, 8
      %s694 = scalar_lea.vmem %s7, %s693
      // Predicated region
      $region49: #{scale_conv_vgroups_forward.1} parent=47 // pred_check
        %p695 = pneg %p193
      $region50: #{scale_conv_vgroups_forward.1} parent=47 // pred_check_branch
        %697 = sbr.rel (%p695) target = $region52
      $region51: #{scale_conv_vgroups_forward.1} parent=47 // pred_region
        _
      $region52: #{scale_conv_vgroups_forward.1} parent=47 // pred_fallthru
        _
    $region48: #{scale_conv_vgroups_forward.1} parent=5 // pred_fallthru
      _
    %p698 = scmp.le.s32.totalorder 2, %s13
    // Predicated region
    $region53: #{scale_conv_vgroups_forward.1} parent=5 // pred_check
      %p699 = pneg %p698
    $region54: #{scale_conv_vgroups_forward.1} parent=5 // pred_check_branch
      %701 = sbr.rel (%p699) target = $region56
    $region55: #{scale_conv_vgroups_forward.1} parent=5 // pred_region
      %s702 = ssub.s32 %s13, 2
      // Predicated region
      $region57: #{scale_conv_vgroups_forward.1} parent=55 // pred_check
        %p703 = pneg %p199
      $region58: #{scale_conv_vgroups_forward.1} parent=55 // pred_check_branch
        %705 = sbr.rel (%p703) target = $region60
      $region59: #{scale_conv_vgroups_forward.1} parent=55 // pred_region
        %p706 = scmp.lt.s32.totalorder %s19, 1
        %s707 = scalar_select %p706, %s19, 1
        %s708 = smul.addr %s707, 2
        %s709 = smul.addr %s708, 8
        %s710 = scalar_lea.vmem %s7, %s709
      $region60: #{scale_conv_vgroups_forward.1} parent=55 // pred_fallthru
        _
    $region56: #{scale_conv_vgroups_forward.1} parent=5 // pred_fallthru
      _
  $region6: #{scale_conv_vgroups_forward.1} parent=0 // loop_footer
    %s17 = sadd.s32 1, %s13
  $region7: #{scale_conv_vgroups_forward.1} parent=0 // loop_footer_branch
    %12 = sbr.rel target = $region3
  $region8: #{scale_conv_vgroups_forward.1} parent=0 // loop_exit
    _

</llo_original>
